<compile_context>
chip_gen: v7x
topology: tpu7x:2x2x1
jax: 0.10.0
libtpu: 0.0.40
codegen_flags: <defaults>
</compile_context>

<pallas_src>
import functools

import jax
import jax.numpy as jnp
from jax.experimental import pallas as pl
from jax.experimental.pallas import tpu as pltpu


def _round_up(x, m):
    return (x + m - 1) // m * m


def _sublane(dtype):
    # Native sublane tiling: 8 for 4-byte, 16 for 2-byte, 32 for 1-byte dtypes.
    return {4: 8, 2: 16, 1: 32}.get(jnp.dtype(dtype).itemsize, 8)


_TM_MAX = 512                       # also the "whole-M-in-one-block" threshold
_TN_MAX = 512
_TK_MAX = 1024
_VMEM_BUDGET = 24 * 1024 * 1024     # conservative cross-generation pipeline budget


def _pipeline_vmem_bytes(tm, tn, tk, x_isz, w_isz, out_isz):
    """Double-buffered pipeline working set for one grid step."""
    return (2 * tm * tk * x_isz      # x tiles (double-buffered)
            + 2 * tk * tn * w_isz    # W.T tiles (double-buffered)
            + 2 * tn * 4             # bias tile (f32, double-buffered)
            + 2 * tm * tn * out_isz  # output tiles (double-buffered)
            + tm * tn * 4)           # f32 accumulator scratch


def _linear_kernel(x_ref, w_ref, b_ref, o_ref, acc_ref):
    # x_ref: (tm, tk), w_ref: (tk, tn), b_ref: (1, tn), o_ref: (tm, tn)
    # acc_ref: (tm, tn) f32 scratch, resident across the innermost K grid axis.
    k = pl.program_id(2)
    part = jnp.dot(x_ref[...], w_ref[...], preferred_element_type=jnp.float32)

    @pl.when(k == 0)
    def _first():        # fused init: overwrite (no zero-fill + extra acc load)
        acc_ref[...] = part

    @pl.when(k > 0)
    def _accum():
        acc_ref[...] += part

    @pl.when(k == pl.num_programs(2) - 1)
    def _finalize():     # bias add + downcast + single store per output tile
        o_ref[...] = (acc_ref[...] + b_ref[...].astype(jnp.float32)).astype(
            o_ref.dtype
        )


@functools.partial(jax.jit, static_argnames=("n_out", "tn", "tk", "out_dtype"))
def _linear_forward(x, w_p, b_p, *, n_out, tn, tk, out_dtype):
    B, K = x.shape
    Kp, Np = w_p.shape
    x_isz = jnp.dtype(x.dtype).itemsize
    w_isz = jnp.dtype(w_p.dtype).itemsize
    out_isz = jnp.dtype(out_dtype).itemsize
    sub = max(_sublane(x.dtype), _sublane(out_dtype))

    # --- M tile: whole batch in one block when small/medium, so W is streamed
    # from HBM exactly once per forward; otherwise 512-row blocks.
    Mp_min = _round_up(B, sub)
    tm = Mp_min if Mp_min <= _TM_MAX else _TM_MAX
    while (_pipeline_vmem_bytes(tm, tn, tk, x_isz, w_isz, out_isz) > _VMEM_BUDGET
           and tm > sub):
        tm = max(sub, _round_up(tm // 2, sub))
    Mp = _round_up(B, tm)

    # Pad x only when needed (zero K-padding contributes nothing to the dot).
    x_p = x if (Mp, Kp) == (B, K) else jnp.pad(x, ((0, Mp - B), (0, Kp - K)))

    grid = (Mp // tm, Np // tn, Kp // tk)
    gm, gn, _ = grid

    # Explicit VMEM sizing, portable across v5e/v6e/v7x scoped defaults.
    ws = _pipeline_vmem_bytes(tm, tn, tk, x_isz, w_isz, out_isz)
    vmem_limit = int(min(max(2 * ws, 32 * 1024 * 1024), 48 * 1024 * 1024))

    # Advisory cost: actual streamed traffic (x read once per N block, W once
    # per M block, padded output written once).
    cost = pl.CostEstimate(
        flops=2 * Mp * Kp * Np,
        transcendentals=0,
        bytes_accessed=int(
            Mp * Kp * x_isz * gn
            + Kp * Np * w_isz * gm
            + Np * 4 * gm
            + Mp * Np * out_isz
        ),
    )

    out = pl.pallas_call(
        _linear_kernel,
        out_shape=jax.ShapeDtypeStruct((Mp, Np), out_dtype),
        grid_spec=pltpu.PrefetchScalarGridSpec(
            num_scalar_prefetch=0,
            grid=grid,
            in_specs=[
                pl.BlockSpec((tm, tk), lambda i, j, k: (i, k)),   # x tile
                # NOTE: pipeline_mode=pl.Buffered(3) on this W spec is a useful
                # extra knob on HBM-bound v5e; left at the default (2) here.
                pl.BlockSpec((tk, tn), lambda i, j, k: (k, j)),   # W.T tile
                pl.BlockSpec((1, tn), lambda i, j, k: (0, j)),    # bias tile
            ],
            out_specs=pl.BlockSpec((tm, tn), lambda i, j, k: (i, j)),
            scratch_shapes=[pltpu.VMEM((tm, tn), jnp.float32)],
        ),
        compiler_params=pltpu.CompilerParams(
            dimension_semantics=("parallel", "parallel", "arbitrary"),
            vmem_limit_bytes=vmem_limit,
        ),
        cost_estimate=cost,
    )(x_p, w_p, b_p)

    # Slice off padding only if there is any (skipped in the aligned case).
    if (Mp, Np) != (B, n_out):
        out = out[:B, :n_out]
    return out


class MyLinearPallas:
    """Pallas equivalent of the PyTorch MyLinear module (y = x @ W.T + b).

    Weight layout conversion (transpose to (K, N)) and padding to tile
    multiples happen ONCE here, at parameter-load time, not per forward call.
    """

    def __init__(self, w, b, *, compute_dtype=None):
        w = jnp.asarray(w)           # torch layout: (outp, inp) = (N, K)
        b = jnp.asarray(b)
        N, K = w.shape
        assert b.shape == (N,)
        self.N, self.K = N, K
        self.compute_dtype = compute_dtype
        if compute_dtype is not None:
            w = w.astype(compute_dtype)      # e.g. bf16 weights on v6e/v7x

        tn, tk = self._choose_nk_tiles(K, N)
        self.tn, self.tk = tn, tk
        Kp, Np = _round_up(K, tk), _round_up(N, tn)

        # One-time transpose + pad: (N, K) -> padded (Kp, Np). Feeds the MXU
        # directly (lane-dense output N) with no per-call weight copy.
        wt = w.T
        self.w_p = wt if (Kp, Np) == (K, N) else jnp.pad(
            wt, ((0, Kp - K), (0, Np - N)))
        b32 = b.astype(jnp.float32).reshape(1, N)
        self.b_p = b32 if Np == N else jnp.pad(b32, ((0, 0), (0, Np - N)))

    @staticmethod
    def _choose_nk_tiles(K, N):
        # Lane-dense, MXU-width-friendly tiles: always multiples of 128 (v5e
        # 4x128 MXU), 256/512 where the shape allows (v6e/v7x 2x256 MXU).
        tn = min(_TN_MAX, _round_up(N, 128))
        tk = min(_TK_MAX, _round_up(K, 128))
        # v7x megacore: if all of N fits a single tile, halve tn (only when it
        # adds zero extra padding) so the parallel grid axes expose >= 2
        # blocks and both TensorCores get work.
        Np = _round_up(N, tn)
        if Np // tn == 1 and tn > 128:
            half = _round_up(tn // 2, 128)
            if half < tn and _round_up(N, half) == Np:
                tn = half
        return tn, tk

    def __call__(self, x):
        assert x.ndim == 2 and x.shape[1] == self.K, x.shape
        out_dtype = jnp.dtype(x.dtype)
        if self.compute_dtype is not None and x.dtype != self.compute_dtype:
            x = x.astype(self.compute_dtype)
        return _linear_forward(
            x, self.w_p, self.b_p,
            n_out=self.N, tn=self.tn, tk=self.tk, out_dtype=out_dtype)


def _reference(x, w, b):
    return jnp.matmul(x, w.T, precision=jax.lax.Precision.HIGHEST) + b


if __name__ == "__main__":
    key = jax.random.PRNGKey(0)
    kx, kw, kb = jax.random.split(key, 3)

    # Small shapes consistent with MyLinear(inp, outp): x is (batch, inp).
    batch, inp, outp = 8, 32, 16
    x = jax.random.normal(kx, (batch, inp), dtype=jnp.float32)
    w = jax.random.normal(kw, (outp, inp), dtype=jnp.float32)  # torch layout
    b = jax.random.normal(kb, (outp,), dtype=jnp.float32)

    layer = MyLinearPallas(w, b)
    y = layer(x)
    jax.block_until_ready(y)
    assert y.shape == (batch, outp)
    assert jnp.allclose(y, _reference(x, w, b), atol=1e-3, rtol=1e-3)

    # Larger check: multi-step K accumulation (Kp//tk == 2), two N blocks
    # (padding-free megacore split), whole-M-in-one-block tm, no x padding.
    # Tolerance is intentionally loose enough to accommodate the MXU's
    # default-precision f32 passes vs. the HIGHEST-precision reference.
    kx2, kw2, kb2 = jax.random.split(jax.random.PRNGKey(1), 3)
    B2, K2, N2 = 256, 2048, 512
    x2 = jax.random.normal(kx2, (B2, K2), dtype=jnp.float32)
    w2 = jax.random.normal(kw2, (N2, K2), dtype=jnp.float32)
    b2 = jax.random.normal(kb2, (N2,), dtype=jnp.float32)

    layer2 = MyLinearPallas(w2, b2)
    y2 = layer2(x2)
    jax.block_until_ready(y2)
    assert y2.shape == (B2, N2)
    assert jnp.allclose(y2, _reference(x2, w2, b2), atol=2e-2, rtol=2e-2)

    print("KERNEL_OK")
</pallas_src>

<mosaic_0001>
module attributes {stable_mosaic.version = 11 : i64} {
  func.func @_linear_kernel(%arg0: i32, %arg1: i32, %arg2: i32, %arg3: memref<8x128xf32, #tpu.memory_space<vmem>>, %arg4: memref<128x128xf32, #tpu.memory_space<vmem>>, %arg5: memref<1x128xf32, #tpu.memory_space<vmem>>, %arg6: memref<8x128xf32, #tpu.memory_space<vmem>>, %arg7: memref<8x128xf32, #tpu.memory_space<vmem>>) attributes {dimension_semantics = [#tpu.dimension_semantics<parallel>, #tpu.dimension_semantics<parallel>, #tpu.dimension_semantics<arbitrary>], iteration_bounds = array<i64: 1, 1, 1>, scalar_prefetch = 0 : i64, scratch_operands = 1 : i64, tpu.core_type = #tpu.core_type<tc>, window_params = [{transform_indices = @transform_0, window_bounds = array<i64: 8, 128>}, {transform_indices = @transform_1, window_bounds = array<i64: 128, 128>}, {transform_indices = @transform_2, window_bounds = array<i64: 1, 128>}, {transform_indices = @transform_3, window_bounds = array<i64: 8, 128>}]} {
    %c0 = arith.constant 0 : index
    %c0_0 = arith.constant 0 : index
    %0 = vector.load %arg3[%c0, %c0_0] : memref<8x128xf32, #tpu.memory_space<vmem>>, vector<8x128xf32>
    %c0_1 = arith.constant 0 : index
    %c0_2 = arith.constant 0 : index
    %1 = vector.load %arg4[%c0_1, %c0_2] : memref<128x128xf32, #tpu.memory_space<vmem>>, vector<128x128xf32>
    %cst = arith.constant dense<0.000000e+00> : vector<8x128xf32>
    %2 = tpu.matmul %0, %1, %cst {dimension_numbers = #tpu.dot_dimension_numbers<[1], [0], [0], [1], [0, 0, 1, 1], [], []>} : vector<8x128xf32>, vector<128x128xf32>, vector<8x128xf32> -> vector<8x128xf32>
    %c0_i32 = arith.constant 0 : i32
    %3 = arith.cmpi eq, %arg2, %c0_i32 : i32
    %4 = arith.extui %3 : i1 to i32
    %c0_i32_3 = arith.constant 0 : i32
    %5 = arith.cmpi ne, %4, %c0_i32_3 : i32
    scf.if %5 {
      %c0_8 = arith.constant 0 : index
      %c0_9 = arith.constant 0 : index
      %12 = vector.load %arg7[%c0_8, %c0_9] : memref<8x128xf32, #tpu.memory_space<vmem>>, vector<8x128xf32>
      tpu.vector_store %arg7[%c0_8, %c0_9], %2 {strides = array<i32>} : memref<8x128xf32, #tpu.memory_space<vmem>>, vector<8x128xf32>,
    } else {
    }
    %c0_i32_4 = arith.constant 0 : i32
    %6 = arith.cmpi sgt, %arg2, %c0_i32_4 : i32
    %7 = arith.extui %6 : i1 to i32
    %c0_i32_5 = arith.constant 0 : i32
    %8 = arith.cmpi ne, %7, %c0_i32_5 : i32
    scf.if %8 {
      %c0_8 = arith.constant 0 : index
      %c0_9 = arith.constant 0 : index
      %12 = vector.load %arg7[%c0_8, %c0_9] : memref<8x128xf32, #tpu.memory_space<vmem>>, vector<8x128xf32>
      %13 = arith.addf %12, %2 : vector<8x128xf32>
      %c0_10 = arith.constant 0 : index
      %c0_11 = arith.constant 0 : index
      %14 = vector.load %arg7[%c0_10, %c0_11] : memref<8x128xf32, #tpu.memory_space<vmem>>, vector<8x128xf32>
      tpu.vector_store %arg7[%c0_10, %c0_11], %13 {strides = array<i32>} : memref<8x128xf32, #tpu.memory_space<vmem>>, vector<8x128xf32>,
    } else {
    }
    %c0_i32_6 = arith.constant 0 : i32
    %9 = arith.cmpi eq, %arg2, %c0_i32_6 : i32
    %10 = arith.extui %9 : i1 to i32
    %c0_i32_7 = arith.constant 0 : i32
    %11 = arith.cmpi ne, %10, %c0_i32_7 : i32
    scf.if %11 {
      %c0_8 = arith.constant 0 : index
      %c0_9 = arith.constant 0 : index
      %12 = vector.load %arg7[%c0_8, %c0_9] : memref<8x128xf32, #tpu.memory_space<vmem>>, vector<8x128xf32>
      %c0_10 = arith.constant 0 : index
      %c0_11 = arith.constant 0 : index
      %13 = vector.load %arg5[%c0_10, %c0_11] : memref<1x128xf32, #tpu.memory_space<vmem>>, vector<1x128xf32>
      %14 = vector.broadcast %13 : vector<1x128xf32> to vector<8x128xf32>
      %15 = arith.addf %12, %14 : vector<8x128xf32>
      %c0_12 = arith.constant 0 : index
      %c0_13 = arith.constant 0 : index
      %16 = vector.load %arg6[%c0_12, %c0_13] : memref<8x128xf32, #tpu.memory_space<vmem>>, vector<8x128xf32>
      tpu.vector_store %arg6[%c0_12, %c0_13], %15 {strides = array<i32>} : memref<8x128xf32, #tpu.memory_space<vmem>>, vector<8x128xf32>,
    } else {
    }
    return
  }
  func.func @transform_0(%arg0: i32, %arg1: i32, %arg2: i32) -> (i32, i32) {
    %c0_i32 = arith.constant 0 : i32
    return %arg0, %arg2 : i32, i32
  }
  func.func @transform_1(%arg0: i32, %arg1: i32, %arg2: i32) -> (i32, i32) {
    %c0_i32 = arith.constant 0 : i32
    return %arg2, %arg1 : i32, i32
  }
  func.func @transform_2(%arg0: i32, %arg1: i32, %arg2: i32) -> (i32, i32) {
    %c0_i32 = arith.constant 0 : i32
    %c0_i32_0 = arith.constant 0 : i32
    return %c0_i32, %arg1 : i32, i32
  }
  func.func @transform_3(%arg0: i32, %arg1: i32, %arg2: i32) -> (i32, i32) {
    %c0_i32 = arith.constant 0 : i32
    return %arg0, %arg1 : i32, i32
  }
}

</mosaic_0001>

<llo_original>
// kernel: _linear_forward.1
$region0: #{_linear_forward.1}
  #allocation0 [shape = 'u32[]', space=smem, size = 0x4, offset = 0x4, fixed_abs, tag = 'smem constant byte address 0x4 - core index']
  #allocation1 [shape = 'u32[144,128]{1,0:T(1,128)}', space=vmem, size = 0x12000, scoped, tag = 'internal scratch']
  #allocation2 [shape = 'f32[8,128]{1,0:T(8,128)}', space=vmem, size = 0x1000, scoped, tag = 'scratch operand']
  %s0 = inlined_call_operand.vmem [shape: f32[8,128], index: 0, kind: input, shape index: {}]
  %s1 = inlined_call_operand.hbm [shape: f32[128,128], index: 1, kind: input, shape index: {}]
  %s2 = inlined_call_operand.vmem [shape: f32[1,128], index: 2, kind: input, shape index: {}]
  %s3 = inlined_call_operand.hbm [shape: f32[8,128], index: 3, kind: output, shape index: {}]
  %s4 = sld [smem:[#allocation0]]
  $region38: #{_linear_forward.1} parent=0
    _
  %s6 = ssub.s32 1, %s4
  %s7 = scalar_select 0, %s6, %s4
  $region1: #{_linear_forward.1} parent=0
    #allocation3 [shape = 'u8[65536]{0}', space=vmem, size = 0x10000, scoped, tag = 'input window, operand 1, single buffered']
    #allocation4 [shape = 's32[1]{0}', space=sflag, size = 0x4, scoped, tag = 'scoped memory for _linear_forward.1']
    #allocation5 [shape = 's32[1]{0}', space=sflag, size = 0x4, scoped, tag = 'scoped memory for _linear_forward.1']
    #allocation6 [shape = 'u8[4096]{0}', space=vmem, size = 0x1000, scoped, tag = 'output window, operand 0, single buffered']
    %8 = vsyncpa [#allocation4], 0
    %9 = vsyncpa [#allocation5], 0
    // Predicated region
    $region2: #{_linear_forward.1} parent=1 // pred_check
      _
    $region3: #{_linear_forward.1} parent=1 // pred_check_branch
      %11 = sbr.rel (0) target = $region5
    $region4: #{_linear_forward.1} parent=1 // pred_region
      _
    $region5: #{_linear_forward.1} parent=1 // pred_fallthru
      _
    // Predicated region
    $region6: #{_linear_forward.1} parent=1 // pred_check
      _
    $region7: #{_linear_forward.1} parent=1 // pred_check_branch
      %13 = sbr.rel (0) target = $region9
    $region8: #{_linear_forward.1} parent=1 // pred_region
      %s15 = ssub.s32 2048, 2048
      %16 = vsyncadd [#allocation4], %s15
      %s17 = sshll.u32 [#allocation3], 4
      %s18 = int_to_ptr.vmem [resolvable:$true] %s17
      %23 = dma.hbm_to_vmem [thread:$0]  %s1, 2048, %s18, [#allocation4], 128, 128, 8
    $region9: #{_linear_forward.1} parent=1 // pred_fallthru
      _
    // Predicated region
    $region10: #{_linear_forward.1} parent=1 // pred_check
      _
    $region11: #{_linear_forward.1} parent=1 // pred_check_branch
      %25 = sbr.rel (0) target = $region13
    $region12: #{_linear_forward.1} parent=1 // pred_region
      _
    $region13: #{_linear_forward.1} parent=1 // pred_fallthru
      _
    // Predicated region
    $region14: #{_linear_forward.1} parent=1 // pred_check
      _
    $region15: #{_linear_forward.1} parent=1 // pred_check_branch
      %27 = sbr.rel (0) target = $region17
    $region16: #{_linear_forward.1} parent=1 // pred_region
      %28 = dma.done [#allocation4], 2048
    $region17: #{_linear_forward.1} parent=1 // pred_fallthru
      _
    %v29 = vld [vmem:[%s0] sm:$0xff]
    %v30 = vld [vmem:[#allocation3] sm:$0xff]
    %v31 = vld [vmem:[#allocation3 + $0x8] sm:$0xff]
    %v32 = vld [vmem:[#allocation3 + $0x10] sm:$0xff]
    %v33 = vld [vmem:[#allocation3 + $0x18] sm:$0xff]
    %v34 = vld [vmem:[#allocation3 + $0x20] sm:$0xff]
    %v35 = vld [vmem:[#allocation3 + $0x28] sm:$0xff]
    %v36 = vld [vmem:[#allocation3 + $0x30] sm:$0xff]
    %v37 = vld [vmem:[#allocation3 + $0x38] sm:$0xff]
    %v38 = vld [vmem:[#allocation3 + $0x40] sm:$0xff]
    %v39 = vld [vmem:[#allocation3 + $0x48] sm:$0xff]
    %v40 = vld [vmem:[#allocation3 + $0x50] sm:$0xff]
    %v41 = vld [vmem:[#allocation3 + $0x58] sm:$0xff]
    %v42 = vld [vmem:[#allocation3 + $0x60] sm:$0xff]
    %v43 = vld [vmem:[#allocation3 + $0x68] sm:$0xff]
    %v44 = vld [vmem:[#allocation3 + $0x70] sm:$0xff]
    %v45 = vld [vmem:[#allocation3 + $0x78] sm:$0xff]
    %46 = vmatprep.subr.mxu0 0.0
    %47 = vmatpush1.msra.mxu0 %v30
    %48 = vmatprep.subr.mxu0 0.0
    %49 = vmatpush1.msra.mxu0 %v31
    %50 = vmatprep.subr.mxu0 0.0
    %51 = vmatpush1.msra.mxu0 %v32
    %52 = vmatprep.subr.mxu0 0.0
    %53 = vmatpush1.msra.mxu0 %v33
    %54 = vmatprep.subr.mxu0 0.0
    %55 = vmatpush1.msra.mxu0 %v34
    %56 = vmatprep.subr.mxu0 0.0
    %57 = vmatpush1.msra.mxu0 %v35
    %58 = vmatprep.subr.mxu0 0.0
    %59 = vmatpush1.msra.mxu0 %v36
    %60 = vmatprep.subr.mxu0 0.0
    %61 = vmatpush1.msra.mxu0 %v37
    %62 = vmatprep.subr.mxu0 0.0
    %63 = vmatpush1.msra.mxu0 %v38
    %64 = vmatprep.subr.mxu0 0.0
    %65 = vmatpush1.msra.mxu0 %v39
    %66 = vmatprep.subr.mxu0 0.0
    %67 = vmatpush1.msra.mxu0 %v40
    %68 = vmatprep.subr.mxu0 0.0
    %69 = vmatpush1.msra.mxu0 %v41
    %70 = vmatprep.subr.mxu0 0.0
    %71 = vmatpush1.msra.mxu0 %v42
    %72 = vmatprep.subr.mxu0 0.0
    %73 = vmatpush1.msra.mxu0 %v43
    %74 = vmatprep.subr.mxu0 0.0
    %75 = vmatpush1.msra.mxu0 %v44
    %76 = vmatprep.subr.mxu0 0.0
    %77 = vmatpush1.msra.mxu0 %v45
    %78 = vmatprep.subr.mxu0 0.0
    %79 = vmatpush1.msra.mxu0 0.0
    %80 = vmatprep.subr.mxu0 0.0
    %81 = vmatpush1.msra.mxu0 0.0
    %82 = vmatprep.subr.mxu0 0.0
    %83 = vmatpush1.msra.mxu0 0.0
    %84 = vmatprep.subr.mxu0 0.0
    %85 = vmatpush1.msra.mxu0 0.0
    %86 = vmatprep.subr.mxu0 0.0
    %87 = vmatpush1.msra.mxu0 0.0
    %88 = vmatprep.subr.mxu0 0.0
    %89 = vmatpush1.msra.mxu0 0.0
    %90 = vmatprep.subr.mxu0 0.0
    %91 = vmatpush1.msra.mxu0 0.0
    %92 = vmatprep.subr.mxu0 0.0
    %93 = vmatpush1.msra.mxu0 0.0
    %94 = vmatprep.subr.mxu0 0.0
    %95 = vmatpush1.msra.mxu0 0.0
    %96 = vmatprep.subr.mxu0 0.0
    %97 = vmatpush1.msra.mxu0 0.0
    %98 = vmatprep.subr.mxu0 0.0
    %99 = vmatpush1.msra.mxu0 0.0
    %100 = vmatprep.subr.mxu0 0.0
    %101 = vmatpush1.msra.mxu0 0.0
    %102 = vmatprep.subr.mxu0 0.0
    %103 = vmatpush1.msra.mxu0 0.0
    %104 = vmatprep.subr.mxu0 0.0
    %105 = vmatpush1.msra.mxu0 0.0
    %106 = vmatprep.subr.mxu0 0.0
    %107 = vmatpush1.msra.mxu0 0.0
    %108 = vmatprep.subr.mxu0 0.0
    %109 = vmatpush1.msra.mxu0 0.0
    %110 = vmatprep.mubr.f32.mxu0 0.0
    %111 = vmatmul.mubr.f32.gmra.mrb[0].mxu0 %v29
    %v112 = vpop.f32.mrb[0].mxu0
    %v113 = vadd.f32 0.0, %v112
    %v114 = vpop.f32.mrb[0].mxu0
    %115 = vdwg.mxu0
    %p116 = scmp.eq.s32.totalorder 0, 0
    // Predicated region
    $region18: #{_linear_forward.1} parent=1 // pred_check
      %p117 = pneg %p116
    $region19: #{_linear_forward.1} parent=1 // pred_check_branch
      %119 = sbr.rel (%p117) target = $region21
    $region20: #{_linear_forward.1} parent=1 // pred_region
      %120 = vst [vmem:[#allocation2] sm:$0xff] %v113
    $region21: #{_linear_forward.1} parent=1 // pred_fallthru
      _
    %p121 = scmp.gt.s32.totalorder 0, 0
    // Predicated region
    $region22: #{_linear_forward.1} parent=1 // pred_check
      %p122 = pneg %p121
    $region23: #{_linear_forward.1} parent=1 // pred_check_branch
      %124 = sbr.rel (%p122) target = $region25
    $region24: #{_linear_forward.1} parent=1 // pred_region
      %v125 = vld [vmem:[#allocation2] sm:$0xff]
      %v126 = vadd.f32 %v125, %v113
      %127 = vst [vmem:[#allocation2] sm:$0xff] %v126
    $region25: #{_linear_forward.1} parent=1 // pred_fallthru
      _
    // Predicated region
    $region26: #{_linear_forward.1} parent=1 // pred_check
      %p128 = pneg %p116
    $region27: #{_linear_forward.1} parent=1 // pred_check_branch
      %130 = sbr.rel (%p128) target = $region29
    $region28: #{_linear_forward.1} parent=1 // pred_region
      %v131 = vld [vmem:[#allocation2] sm:$0xff]
      %v132 = vld [vmem:[%s2] sm:$0x1]
      %v134 = vlaneseq
      %v135 = vshrl.u32 %v134, 7
      %v136 = vsub.s32 0, %v135
      %v137 = vrot.slane %v132, %v136
      %v139 = vadd.f32 %v131, %v137
      %140 = vst [vmem:[#allocation6] sm:$0xff] %v139
    $region29: #{_linear_forward.1} parent=1 // pred_fallthru
      _
    // Predicated region
    $region30: #{_linear_forward.1} parent=1 // pred_check
      _
    $region31: #{_linear_forward.1} parent=1 // pred_check_branch
      %142 = sbr.rel (0) target = $region33
    $region32: #{_linear_forward.1} parent=1 // pred_region
      %s144 = ssub.s32 128, 128
      %145 = vsyncadd [#allocation5], %s144
      %s147 = sshll.u32 [#allocation6], 4
      %s148 = int_to_ptr.vmem [resolvable:$true] %s147
      %150 = dma.vmem_to_hbm [thread:$0]  %s148, 128, %s3, [#allocation5]
    $region33: #{_linear_forward.1} parent=1 // pred_fallthru
      _
    // Predicated region
    $region34: #{_linear_forward.1} parent=1 // pred_check
      _
    $region35: #{_linear_forward.1} parent=1 // pred_check_branch
      %152 = sbr.rel (0) target = $region37
    $region36: #{_linear_forward.1} parent=1 // pred_region
      %153 = dma.done [#allocation5], 128
    $region37: #{_linear_forward.1} parent=1 // pred_fallthru
      _
    %154 = vsyncpa [#allocation4], 1
    %155 = vsyncpa [#allocation5], 1

</llo_original>
